<compile_context>
chip_gen: v7x
topology: tpu7x:2x2x1
jax: 0.10.0
libtpu: 0.0.40
codegen_flags: <defaults>
</compile_context>

<pallas_src>
import functools

import jax
import jax.numpy as jnp
from jax.experimental import pallas as pl
from jax.experimental.pallas import tpu as pltpu


def _round_up(a: int, b: int) -> int:
    return ((a + b - 1) // b) * b


def _vmem_limit_bytes():
    # Default scoped VMEM (16/32 MiB) is far below physical; raise it with headroom.
    try:
        return int(pltpu.get_tpu_info().vmem_capacity_bytes * 3 // 4)
    except Exception:
        return None


_VMEM_LIMIT = _vmem_limit_bytes()


def gating_kernel(x_ref, wg_ref, wc_ref, wo_ref, o_ref, acc_ref):
    # x_ref : (tm, D)    tile of flattened tokens
    # wg_ref: (D, th)    gate projection tile
    # wc_ref: (D, th)    content projection tile
    # wo_ref: (th, D)    output projection tile
    # o_ref : (tm, D)    output tile (resident across the H axis)
    # acc_ref: (tm, D)   f32 accumulator
    j = pl.program_id(1)

    @pl.when(j == 0)
    def _init():
        acc_ref[...] = jnp.zeros_like(acc_ref)

    x = x_ref[...]
    g = jnp.dot(x, wg_ref[...], preferred_element_type=jnp.float32)   # (tm, th)
    c = jnp.dot(x, wc_ref[...], preferred_element_type=jnp.float32)   # (tm, th)
    h = jax.nn.silu(g) * c                                            # gate * content
    acc_ref[...] += jnp.dot(h.astype(x.dtype), wo_ref[...],
                            preferred_element_type=jnp.float32)       # (tm, D)

    @pl.when(j == pl.num_programs(1) - 1)
    def _finalize():
        o_ref[...] = acc_ref[...].astype(o_ref.dtype)


def prepare_weights(w_in, w_out):
    """One-time weight re-layout (do at weight-load time, NOT every forward).

    w_in : (2H, D) = nn.Linear(dim, 2*hidden, bias=False).weight
    w_out: (D, H)  = nn.Linear(hidden, dim, bias=False).weight
    Returns wg (D, H), wc (D, H), wo (H, D).
    """
    H = w_in.shape[0] // 2
    wg = jnp.transpose(w_in[:H, :])    # gate half    (x.view(B,T,2,-1)[...,0,:])
    wc = jnp.transpose(w_in[H:, :])    # content half (x.view(B,T,2,-1)[...,1,:])
    wo = jnp.transpose(w_out)
    return wg, wc, wo


@functools.partial(jax.jit, static_argnames=("tm", "th"))
def activation_gating(x, wg, wc, wo, *, tm=256, th=512):
    """Forward pass of ActivationGating.

    x : [B, T, D]; wg/wc: [D, H]; wo: [H, D]  (from prepare_weights)
    tm: token-tile rows (128 on v5e, 256-512 on v6e/v7x).
    th: hidden-tile width (multiple of 128).
    Returns [B, T, D].
    """
    B, T, D = x.shape
    H = wg.shape[1]
    M = B * T
    xm = x.reshape(M, D)

    # ---- M tiling: clamp tile to M, pad rows so the grid divides evenly ----
    tm_eff = _round_up(min(tm, _round_up(M, 8)), 8)
    M_pad = _round_up(M, tm_eff)
    if M_pad != M:
        xm = jnp.pad(xm, ((0, M_pad - M), (0, 0)))

    # ---- H tiling: lane-aligned tiles, pad H if it is ragged ----
    if H <= th:
        th_eff, H_pad = H, H
    else:
        th_eff = _round_up(min(th, H), 128)
        H_pad = _round_up(H, th_eff)
        if H_pad != H:
            wg = jnp.pad(wg, ((0, 0), (0, H_pad - H)))
            wc = jnp.pad(wc, ((0, 0), (0, H_pad - H)))
            wo = jnp.pad(wo, ((0, H_pad - H), (0, 0)))
    nh = H_pad // th_eff
    n_m = M_pad // tm_eff

    x_isz = jnp.dtype(x.dtype).itemsize
    w_isz = jnp.dtype(wg.dtype).itemsize
    cost = pl.CostEstimate(
        flops=int(6 * M_pad * D * H_pad),
        transcendentals=int(M_pad * H_pad),
        bytes_accessed=int(2 * M_pad * D * x_isz + n_m * 3 * D * H_pad * w_isz),
    )

    cp_kwargs = dict(dimension_semantics=("parallel", "arbitrary"))
    if _VMEM_LIMIT is not None:
        cp_kwargs["vmem_limit_bytes"] = _VMEM_LIMIT

    out = pl.pallas_call(
        gating_kernel,
        out_shape=jax.ShapeDtypeStruct((M_pad, D), x.dtype),
        grid_spec=pltpu.PrefetchScalarGridSpec(
            num_scalar_prefetch=0,
            grid=(n_m, nh),
            in_specs=[
                pl.BlockSpec((tm_eff, D), lambda i, j: (i, 0)),
                pl.BlockSpec((D, th_eff), lambda i, j: (0, j)),
                pl.BlockSpec((D, th_eff), lambda i, j: (0, j)),
                pl.BlockSpec((th_eff, D), lambda i, j: (j, 0)),
            ],
            out_specs=pl.BlockSpec((tm_eff, D), lambda i, j: (i, 0)),
            scratch_shapes=[pltpu.VMEM((tm_eff, D), jnp.float32)],
        ),
        compiler_params=pltpu.CompilerParams(**cp_kwargs),
        cost_estimate=cost,
    )(xm, wg, wc, wo)

    return out[:M].reshape(B, T, D)


def reference_gating(x, w_in, w_out):
    """Pure-JAX reference mirroring the PyTorch gating_forward_kernel."""
    h = jnp.einsum("btd,hd->bth", x, w_in)            # F.linear(x, weight_in)
    B, T, _ = h.shape
    h = h.reshape(B, T, 2, -1)
    h = jax.nn.silu(h[..., 0, :]) * h[..., 1, :]
    return jnp.einsum("bth,dh->btd", h, w_out)        # F.linear(h, weight_out)


if __name__ == "__main__":
    # --- config 1: ActivationGating(dim=32, dim_feedforward=4*dim) -> hidden=84
    dim = 32
    dim_feedforward = 4 * dim
    hidden = 21 * dim // 8 if dim_feedforward == 4 * dim else 2 * dim_feedforward // 3
    B, T = 2, 8

    key = jax.random.PRNGKey(0)
    k_x, k_in, k_out, k_x2 = jax.random.split(key, 4)
    x = jax.random.normal(k_x, (B, T, dim), dtype=jnp.float32)
    w_in = jax.random.normal(k_in, (2 * hidden, dim), dtype=jnp.float32) * (dim ** -0.5)
    w_out = jax.random.normal(k_out, (dim, hidden), dtype=jnp.float32) * (hidden ** -0.5)

    wg, wc, wo = prepare_weights(w_in, w_out)         # one-time relayout
    y = jax.block_until_ready(activation_gating(x, wg, wc, wo))
    y_ref = reference_gating(x, w_in, w_out)
    assert y.shape == (B, T, dim)
    assert jnp.allclose(y, y_ref, atol=2e-4, rtol=2e-4)

    # --- config 2: exercises H-tiling (nh>1), hidden padding and ragged-M padding
    dim2 = 128
    hidden2 = 21 * dim2 // 8                          # 336 (padded to 384 with th=128)
    B2, T2 = 2, 100                                   # M=200 -> padded to 256 with tm=128
    x2 = jax.random.normal(k_x2, (B2, T2, dim2), dtype=jnp.float32)
    kk = jax.random.split(k_in, 2)
    w_in2 = jax.random.normal(kk[0], (2 * hidden2, dim2), jnp.float32) * (dim2 ** -0.5)
    w_out2 = jax.random.normal(kk[1], (dim2, hidden2), jnp.float32) * (hidden2 ** -0.5)
    wg2, wc2, wo2 = prepare_weights(w_in2, w_out2)
    y2 = jax.block_until_ready(activation_gating(x2, wg2, wc2, wo2, tm=128, th=128))
    y2_ref = reference_gating(x2, w_in2, w_out2)
    assert y2.shape == (B2, T2, dim2)
    assert jnp.allclose(y2, y2_ref, atol=5e-4, rtol=5e-4)

    print("KERNEL_OK")
</pallas_src>

<mosaic_0001>
module attributes {stable_mosaic.version = 11 : i64} {
  func.func @gating_kernel(%arg0: i32, %arg1: i32, %arg2: memref<16x32xf32, #tpu.memory_space<vmem>>, %arg3: memref<32x84xf32, #tpu.memory_space<vmem>>, %arg4: memref<32x84xf32, #tpu.memory_space<vmem>>, %arg5: memref<84x32xf32, #tpu.memory_space<vmem>>, %arg6: memref<16x32xf32, #tpu.memory_space<vmem>>, %arg7: memref<16x32xf32, #tpu.memory_space<vmem>>) attributes {dimension_semantics = [#tpu.dimension_semantics<parallel>, #tpu.dimension_semantics<arbitrary>], iteration_bounds = array<i64: 1, 1>, scalar_prefetch = 0 : i64, scratch_operands = 1 : i64, tpu.core_type = #tpu.core_type<tc>, window_params = [{transform_indices = @transform_0, window_bounds = array<i64: 16, 32>}, {transform_indices = @transform_1, window_bounds = array<i64: 32, 84>}, {transform_indices = @transform_2, window_bounds = array<i64: 32, 84>}, {transform_indices = @transform_3, window_bounds = array<i64: 84, 32>}, {transform_indices = @transform_4, window_bounds = array<i64: 16, 32>}]} {
    %c0_i32 = arith.constant 0 : i32
    %0 = arith.cmpi eq, %arg1, %c0_i32 : i32
    %1 = arith.extui %0 : i1 to i32
    %c0_i32_0 = arith.constant 0 : i32
    %2 = arith.cmpi ne, %1, %c0_i32_0 : i32
    scf.if %2 {
      %cst_17 = arith.constant 0.000000e+00 : f32
      %23 = vector.broadcast %cst_17 : f32 to vector<16x32xf32>
      %c0_18 = arith.constant 0 : index
      %c0_19 = arith.constant 0 : index
      %24 = vector.load %arg7[%c0_18, %c0_19] : memref<16x32xf32, #tpu.memory_space<vmem>>, vector<16x32xf32>
      tpu.vector_store %arg7[%c0_18, %c0_19], %23 {strides = array<i32>} : memref<16x32xf32, #tpu.memory_space<vmem>>, vector<16x32xf32>,
    } else {
    }
    %c0 = arith.constant 0 : index
    %c0_1 = arith.constant 0 : index
    %3 = vector.load %arg2[%c0, %c0_1] : memref<16x32xf32, #tpu.memory_space<vmem>>, vector<16x32xf32>
    %c0_2 = arith.constant 0 : index
    %c0_3 = arith.constant 0 : index
    %4 = vector.load %arg3[%c0_2, %c0_3] : memref<32x84xf32, #tpu.memory_space<vmem>>, vector<32x84xf32>
    %cst = arith.constant dense<0.000000e+00> : vector<16x84xf32>
    %5 = tpu.matmul %3, %4, %cst {dimension_numbers = #tpu.dot_dimension_numbers<[1], [0], [0], [1], [0, 0, 1, 1], [], []>} : vector<16x32xf32>, vector<32x84xf32>, vector<16x84xf32> -> vector<16x84xf32>
    %c0_4 = arith.constant 0 : index
    %c0_5 = arith.constant 0 : index
    %6 = vector.load %arg4[%c0_4, %c0_5] : memref<32x84xf32, #tpu.memory_space<vmem>>, vector<32x84xf32>
    %cst_6 = arith.constant dense<0.000000e+00> : vector<16x84xf32>
    %7 = tpu.matmul %3, %6, %cst_6 {dimension_numbers = #tpu.dot_dimension_numbers<[1], [0], [0], [1], [0, 0, 1, 1], [], []>} : vector<16x32xf32>, vector<32x84xf32>, vector<16x84xf32> -> vector<16x84xf32>
    %8 = arith.negf %5 : vector<16x84xf32>
    %9 = math.exp %8 : vector<16x84xf32>
    %cst_7 = arith.constant 1.000000e+00 : f32
    %10 = vector.broadcast %cst_7 : f32 to vector<16x84xf32>
    %11 = arith.addf %10, %9 : vector<16x84xf32>
    %12 = arith.divf %10, %11 : vector<16x84xf32>
    %13 = arith.mulf %5, %12 : vector<16x84xf32>
    %14 = arith.mulf %13, %7 : vector<16x84xf32>
    %c0_8 = arith.constant 0 : index
    %c0_9 = arith.constant 0 : index
    %15 = vector.load %arg7[%c0_8, %c0_9] : memref<16x32xf32, #tpu.memory_space<vmem>>, vector<16x32xf32>
    %c0_10 = arith.constant 0 : index
    %c0_11 = arith.constant 0 : index
    %16 = vector.load %arg5[%c0_10, %c0_11] : memref<84x32xf32, #tpu.memory_space<vmem>>, vector<84x32xf32>
    %cst_12 = arith.constant dense<0.000000e+00> : vector<16x32xf32>
    %17 = tpu.matmul %14, %16, %cst_12 {dimension_numbers = #tpu.dot_dimension_numbers<[1], [0], [0], [1], [0, 0, 1, 1], [], []>} : vector<16x84xf32>, vector<84x32xf32>, vector<16x32xf32> -> vector<16x32xf32>
    %18 = arith.addf %15, %17 : vector<16x32xf32>
    %c0_13 = arith.constant 0 : index
    %c0_14 = arith.constant 0 : index
    %19 = vector.load %arg7[%c0_13, %c0_14] : memref<16x32xf32, #tpu.memory_space<vmem>>, vector<16x32xf32>
    tpu.vector_store %arg7[%c0_13, %c0_14], %18 {strides = array<i32>} : memref<16x32xf32, #tpu.memory_space<vmem>>, vector<16x32xf32>,
    %c0_i32_15 = arith.constant 0 : i32
    %20 = arith.cmpi eq, %arg1, %c0_i32_15 : i32
    %21 = arith.extui %20 : i1 to i32
    %c0_i32_16 = arith.constant 0 : i32
    %22 = arith.cmpi ne, %21, %c0_i32_16 : i32
    scf.if %22 {
      %c0_17 = arith.constant 0 : index
      %c0_18 = arith.constant 0 : index
      %23 = vector.load %arg7[%c0_17, %c0_18] : memref<16x32xf32, #tpu.memory_space<vmem>>, vector<16x32xf32>
      %c0_19 = arith.constant 0 : index
      %c0_20 = arith.constant 0 : index
      %24 = vector.load %arg6[%c0_19, %c0_20] : memref<16x32xf32, #tpu.memory_space<vmem>>, vector<16x32xf32>
      tpu.vector_store %arg6[%c0_19, %c0_20], %23 {strides = array<i32>} : memref<16x32xf32, #tpu.memory_space<vmem>>, vector<16x32xf32>,
    } else {
    }
    return
  }
  func.func @transform_0(%arg0: i32, %arg1: i32) -> (i32, i32) {
    %c0_i32 = arith.constant 0 : i32
    %c0_i32_0 = arith.constant 0 : i32
    return %arg0, %c0_i32 : i32, i32
  }
  func.func @transform_1(%arg0: i32, %arg1: i32) -> (i32, i32) {
    %c0_i32 = arith.constant 0 : i32
    %c0_i32_0 = arith.constant 0 : i32
    return %c0_i32, %arg1 : i32, i32
  }
  func.func @transform_2(%arg0: i32, %arg1: i32) -> (i32, i32) {
    %c0_i32 = arith.constant 0 : i32
    %c0_i32_0 = arith.constant 0 : i32
    return %c0_i32, %arg1 : i32, i32
  }
  func.func @transform_3(%arg0: i32, %arg1: i32) -> (i32, i32) {
    %c0_i32 = arith.constant 0 : i32
    %c0_i32_0 = arith.constant 0 : i32
    return %arg1, %c0_i32 : i32, i32
  }
  func.func @transform_4(%arg0: i32, %arg1: i32) -> (i32, i32) {
    %c0_i32 = arith.constant 0 : i32
    %c0_i32_0 = arith.constant 0 : i32
    return %arg0, %c0_i32 : i32, i32
  }
}

</mosaic_0001>

<llo_original>
// kernel: activation_gating.1
$region0: #{activation_gating.1}
  #allocation0 [shape = 'u32[]', space=smem, size = 0x4, offset = 0x4, fixed_abs, tag = 'smem constant byte address 0x4 - core index']
  #allocation1 [shape = 'u32[144,128]{1,0:T(1,128)}', space=vmem, size = 0x12000, scoped, tag = 'internal scratch']
  #allocation2 [shape = 'f32[16,32]{1,0:T(8,128)}', space=vmem, size = 0x2000, scoped, tag = 'scratch operand']
  %s0 = inlined_call_operand.vmem [shape: f32[16,32], index: 0, kind: input, shape index: {}]
  %s1 = inlined_call_operand.vmem [shape: f32[32,84], index: 1, kind: input, shape index: {}]
  %s2 = inlined_call_operand.vmem [shape: f32[32,84], index: 2, kind: input, shape index: {}]
  %s3 = inlined_call_operand.vmem [shape: f32[84,32], index: 3, kind: input, shape index: {}]
  %s4 = inlined_call_operand.hbm [shape: f32[16,32], index: 4, kind: output, shape index: {}]
  %s5 = sld [smem:[#allocation0]]
  $region34: #{activation_gating.1} parent=0
    _
  %s7 = ssub.s32 1, %s5
  %s8 = scalar_select 0, %s7, %s5
  $region1: #{activation_gating.1} parent=0
    #allocation3 [shape = 'u8[8192]{0}', space=vmem, size = 0x2000, scoped, tag = 'output window, operand 0, single buffered']
    #allocation4 [shape = 's32[1]{0}', space=sflag, size = 0x4, scoped, tag = 'scoped memory for activation_gating.1']
    %9 = vsyncpa [#allocation4], 0
    // Predicated region
    $region2: #{activation_gating.1} parent=1 // pred_check
      _
    $region3: #{activation_gating.1} parent=1 // pred_check_branch
      %11 = sbr.rel (0) target = $region5
    $region4: #{activation_gating.1} parent=1 // pred_region
      _
    $region5: #{activation_gating.1} parent=1 // pred_fallthru
      _
    // Predicated region
    $region6: #{activation_gating.1} parent=1 // pred_check
      _
    $region7: #{activation_gating.1} parent=1 // pred_check_branch
      %13 = sbr.rel (0) target = $region9
    $region8: #{activation_gating.1} parent=1 // pred_region
      _
    $region9: #{activation_gating.1} parent=1 // pred_fallthru
      _
    // Predicated region
    $region10: #{activation_gating.1} parent=1 // pred_check
      _
    $region11: #{activation_gating.1} parent=1 // pred_check_branch
      %15 = sbr.rel (0) target = $region13
    $region12: #{activation_gating.1} parent=1 // pred_region
      _
    $region13: #{activation_gating.1} parent=1 // pred_fallthru
      _
    // Predicated region
    $region14: #{activation_gating.1} parent=1 // pred_check
      _
    $region15: #{activation_gating.1} parent=1 // pred_check_branch
      %17 = sbr.rel (0) target = $region17
    $region16: #{activation_gating.1} parent=1 // pred_region
      _
    $region17: #{activation_gating.1} parent=1 // pred_fallthru
      _
    %p18 = scmp.eq.s32.totalorder 0, 0
    // Predicated region
    $region18: #{activation_gating.1} parent=1 // pred_check
      %p19 = pneg %p18
    $region19: #{activation_gating.1} parent=1 // pred_check_branch
      %21 = sbr.rel (%p19) target = $region21
    $region20: #{activation_gating.1} parent=1 // pred_region
      %vm22 = vcmask 261120
      %23 = vst.msk [vmem:[#allocation2] sm:$0xff] %vm22, 0.0
      %24 = vst.msk [vmem:[#allocation2 + $0x8] sm:$0xff] %vm22, 0.0
    $region21: #{activation_gating.1} parent=1 // pred_fallthru
      _
    %v25 = vld [vmem:[%s0] sm:$0xff]
    %v26 = vld [vmem:[%s0 + $0x8] sm:$0xff]
    %v27 = vld [vmem:[%s1] sm:$0xff]
    %v28 = vld [vmem:[%s1 + $0x8] sm:$0xff]
    %v29 = vld [vmem:[%s1 + $0x10] sm:$0xff]
    %v30 = vld [vmem:[%s1 + $0x18] sm:$0xff]
    %vm31 = vcmask 261120
    %v33 = vsel %vm31, %v25, 0
    %v36 = vsel %vm31, %v26, 0
    %38 = vmatprep.subr.mxu0 0.0
    %39 = vmatpush1.msra.mxu0 %v27
    %40 = vmatprep.subr.mxu0 0.0
    %41 = vmatpush1.msra.mxu0 %v28
    %42 = vmatprep.subr.mxu0 0.0
    %43 = vmatpush1.msra.mxu0 %v29
    %44 = vmatprep.subr.mxu0 0.0
    %45 = vmatpush1.msra.mxu0 %v30
    %46 = vmatprep.subr.mxu0 0.0
    %47 = vmatpush1.msra.mxu0 0.0
    %48 = vmatprep.subr.mxu0 0.0
    %49 = vmatpush1.msra.mxu0 0.0
    %50 = vmatprep.subr.mxu0 0.0
    %51 = vmatpush1.msra.mxu0 0.0
    %52 = vmatprep.subr.mxu0 0.0
    %53 = vmatpush1.msra.mxu0 0.0
    %54 = vmatprep.subr.mxu0 0.0
    %55 = vmatpush1.msra.mxu0 0.0
    %56 = vmatprep.subr.mxu0 0.0
    %57 = vmatpush1.msra.mxu0 0.0
    %58 = vmatprep.subr.mxu0 0.0
    %59 = vmatpush1.msra.mxu0 0.0
    %60 = vmatprep.subr.mxu0 0.0
    %61 = vmatpush1.msra.mxu0 0.0
    %62 = vmatprep.subr.mxu0 0.0
    %63 = vmatpush1.msra.mxu0 0.0
    %64 = vmatprep.subr.mxu0 0.0
    %65 = vmatpush1.msra.mxu0 0.0
    %66 = vmatprep.subr.mxu0 0.0
    %67 = vmatpush1.msra.mxu0 0.0
    %68 = vmatprep.subr.mxu0 0.0
    %69 = vmatpush1.msra.mxu0 0.0
    %70 = vmatprep.subr.mxu0 0.0
    %71 = vmatpush1.msra.mxu0 0.0
    %72 = vmatprep.subr.mxu0 0.0
    %73 = vmatpush1.msra.mxu0 0.0
    %74 = vmatprep.subr.mxu0 0.0
    %75 = vmatpush1.msra.mxu0 0.0
    %76 = vmatprep.subr.mxu0 0.0
    %77 = vmatpush1.msra.mxu0 0.0
    %78 = vmatprep.subr.mxu0 0.0
    %79 = vmatpush1.msra.mxu0 0.0
    %80 = vmatprep.subr.mxu0 0.0
    %81 = vmatpush1.msra.mxu0 0.0
    %82 = vmatprep.subr.mxu0 0.0
    %83 = vmatpush1.msra.mxu0 0.0
    %84 = vmatprep.subr.mxu0 0.0
    %85 = vmatpush1.msra.mxu0 0.0
    %86 = vmatprep.subr.mxu0 0.0
    %87 = vmatpush1.msra.mxu0 0.0
    %88 = vmatprep.subr.mxu0 0.0
    %89 = vmatpush1.msra.mxu0 0.0
    %90 = vmatprep.subr.mxu0 0.0
    %91 = vmatpush1.msra.mxu0 0.0
    %92 = vmatprep.subr.mxu0 0.0
    %93 = vmatpush1.msra.mxu0 0.0
    %94 = vmatprep.subr.mxu0 0.0
    %95 = vmatpush1.msra.mxu0 0.0
    %96 = vmatprep.subr.mxu0 0.0
    %97 = vmatpush1.msra.mxu0 0.0
    %98 = vmatprep.subr.mxu0 0.0
    %99 = vmatpush1.msra.mxu0 0.0
    %100 = vmatprep.subr.mxu0 0.0
    %101 = vmatpush1.msra.mxu0 0.0
    %102 = vmatprep.mubr.f32.mxu0 0.0
    %103 = vmatmul.mubr.f32.gmra.mrb[0].mxu0 %v33
    %v104 = vpop.f32.mrb[0].mxu0
    %v105 = vadd.f32 0.0, %v104
    %v106 = vpop.f32.mrb[0].mxu0
    %107 = vmatprep.mubr.f32.mxu0 0.0
    %108 = vmatmul.mubr.f32.gmra.mrb[0].mxu0 %v36
    %v109 = vpop.f32.mrb[0].mxu0
    %v110 = vadd.f32 0.0, %v109
    %v111 = vpop.f32.mrb[0].mxu0
    %112 = vdwg.mxu0
    %v113 = vld [vmem:[%s2] sm:$0xff]
    %v114 = vld [vmem:[%s2 + $0x8] sm:$0xff]
    %v115 = vld [vmem:[%s2 + $0x10] sm:$0xff]
    %v116 = vld [vmem:[%s2 + $0x18] sm:$0xff]
    %117 = vmatprep.subr.mxu0 0.0
    %118 = vmatpush1.msra.mxu0 %v113
    %119 = vmatprep.subr.mxu0 0.0
    %120 = vmatpush1.msra.mxu0 %v114
    %121 = vmatprep.subr.mxu0 0.0
    %122 = vmatpush1.msra.mxu0 %v115
    %123 = vmatprep.subr.mxu0 0.0
    %124 = vmatpush1.msra.mxu0 %v116
    %125 = vmatprep.subr.mxu0 0.0
    %126 = vmatpush1.msra.mxu0 0.0
    %127 = vmatprep.subr.mxu0 0.0
    %128 = vmatpush1.msra.mxu0 0.0
    %129 = vmatprep.subr.mxu0 0.0
    %130 = vmatpush1.msra.mxu0 0.0
    %131 = vmatprep.subr.mxu0 0.0
    %132 = vmatpush1.msra.mxu0 0.0
    %133 = vmatprep.subr.mxu0 0.0
    %134 = vmatpush1.msra.mxu0 0.0
    %135 = vmatprep.subr.mxu0 0.0
    %136 = vmatpush1.msra.mxu0 0.0
    %137 = vmatprep.subr.mxu0 0.0
    %138 = vmatpush1.msra.mxu0 0.0
    %139 = vmatprep.subr.mxu0 0.0
    %140 = vmatpush1.msra.mxu0 0.0
    %141 = vmatprep.subr.mxu0 0.0
    %142 = vmatpush1.msra.mxu0 0.0
    %143 = vmatprep.subr.mxu0 0.0
    %144 = vmatpush1.msra.mxu0 0.0
    %145 = vmatprep.subr.mxu0 0.0
    %146 = vmatpush1.msra.mxu0 0.0
    %147 = vmatprep.subr.mxu0 0.0
    %148 = vmatpush1.msra.mxu0 0.0
    %149 = vmatprep.subr.mxu0 0.0
    %150 = vmatpush1.msra.mxu0 0.0
    %151 = vmatprep.subr.mxu0 0.0
    %152 = vmatpush1.msra.mxu0 0.0
    %153 = vmatprep.subr.mxu0 0.0
    %154 = vmatpush1.msra.mxu0 0.0
    %155 = vmatprep.subr.mxu0 0.0
    %156 = vmatpush1.msra.mxu0 0.0
    %157 = vmatprep.subr.mxu0 0.0
    %158 = vmatpush1.msra.mxu0 0.0
    %159 = vmatprep.subr.mxu0 0.0
    %160 = vmatpush1.msra.mxu0 0.0
    %161 = vmatprep.subr.mxu0 0.0
    %162 = vmatpush1.msra.mxu0 0.0
    %163 = vmatprep.subr.mxu0 0.0
    %164 = vmatpush1.msra.mxu0 0.0
    %165 = vmatprep.subr.mxu0 0.0
    %166 = vmatpush1.msra.mxu0 0.0
    %167 = vmatprep.subr.mxu0 0.0
    %168 = vmatpush1.msra.mxu0 0.0
    %169 = vmatprep.subr.mxu0 0.0
    %170 = vmatpush1.msra.mxu0 0.0
    %171 = vmatprep.subr.mxu0 0.0
    %172 = vmatpush1.msra.mxu0 0.0
    %173 = vmatprep.subr.mxu0 0.0
    %174 = vmatpush1.msra.mxu0 0.0
    %175 = vmatprep.subr.mxu0 0.0
    %176 = vmatpush1.msra.mxu0 0.0
    %177 = vmatprep.subr.mxu0 0.0
    %178 = vmatpush1.msra.mxu0 0.0
    %179 = vmatprep.subr.mxu0 0.0
    %180 = vmatpush1.msra.mxu0 0.0
    %181 = vmatprep.mubr.f32.mxu0 0.0
    %182 = vmatmul.mubr.f32.gmra.mrb[0].mxu0 %v33
    %v183 = vpop.f32.mrb[0].mxu0
    %v184 = vadd.f32 0.0, %v183
    %v185 = vpop.f32.mrb[0].mxu0
    %186 = vmatprep.mubr.f32.mxu0 0.0
    %187 = vmatmul.mubr.f32.gmra.mrb[0].mxu0 %v36
    %v188 = vpop.f32.mrb[0].mxu0
    %v189 = vadd.f32 0.0, %v188
    %v190 = vpop.f32.mrb[0].mxu0
    %191 = vdwg.mxu0
    %v192 = vxor.u32 %v105, 2147483648
    %v193 = vxor.u32 %v110, 2147483648
    %v194 = vmul.f32 %v192, 1.442695
    %v195 = vpow.pop %v194
    %v196 = vmul.f32 %v193, 1.442695
    %v197 = vpow.pop %v196
    %v198 = vadd.f32 %v195, 1.0
    %v199 = vadd.f32 %v197, 1.0
    %v200 = vrcp.pop %v198
    %v201 = vmul.f32 1.0, %v200
    %v202 = vrcp.pop %v199
    %v203 = vmul.f32 1.0, %v202
    %v204 = vmul.f32 %v105, %v201
    %v205 = vmul.f32 %v110, %v203
    %v206 = vmul.f32 %v204, %v184
    %v207 = vmul.f32 %v205, %v189
    %v208 = vld [vmem:[#allocation2] sm:$0xff]
    %v209 = vld [vmem:[#allocation2 + $0x8] sm:$0xff]
    %v210 = vld [vmem:[%s3] sm:$0xff]
    %v211 = vld [vmem:[%s3 + $0x8] sm:$0xff]
    %v212 = vld [vmem:[%s3 + $0x10] sm:$0xff]
    %v213 = vld [vmem:[%s3 + $0x18] sm:$0xff]
    %v214 = vld [vmem:[%s3 + $0x20] sm:$0xff]
    %v215 = vld [vmem:[%s3 + $0x28] sm:$0xff]
    %v216 = vld [vmem:[%s3 + $0x30] sm:$0xff]
    %v217 = vld [vmem:[%s3 + $0x38] sm:$0xff]
    %v218 = vld [vmem:[%s3 + $0x40] sm:$0xff]
    %v219 = vld [vmem:[%s3 + $0x48] sm:$0xff]
    %v220 = vld [vmem:[%s3 + $0x50] sm:$0xf]
    %vm221 = vcmask 687104
    %v223 = vsel %vm221, %v206, 0
    %v226 = vsel %vm221, %v207, 0
    %vm228 = vcmask 1043456
    %v230 = vsel %vm228, %v220, 0
    %232 = vmatprep.subr.mxu0 0.0
    %233 = vmatpush1.msra.mxu0 %v210
    %234 = vmatprep.subr.mxu0 0.0
    %235 = vmatpush1.msra.mxu0 %v211
    %236 = vmatprep.subr.mxu0 0.0
    %237 = vmatpush1.msra.mxu0 %v212
    %238 = vmatprep.subr.mxu0 0.0
    %239 = vmatpush1.msra.mxu0 %v213
    %240 = vmatprep.subr.mxu0 0.0
    %241 = vmatpush1.msra.mxu0 %v214
    %242 = vmatprep.subr.mxu0 0.0
    %243 = vmatpush1.msra.mxu0 %v215
    %244 = vmatprep.subr.mxu0 0.0
    %245 = vmatpush1.msra.mxu0 %v216
    %246 = vmatprep.subr.mxu0 0.0
    %247 = vmatpush1.msra.mxu0 %v217
    %248 = vmatprep.subr.mxu0 0.0
    %249 = vmatpush1.msra.mxu0 %v218
    %250 = vmatprep.subr.mxu0 0.0
    %251 = vmatpush1.msra.mxu0 %v219
    %252 = vmatprep.subr.mxu0 0.0
    %253 = vmatpush1.msra.mxu0 %v230
    %254 = vmatprep.subr.mxu0 0.0
    %255 = vmatpush1.msra.mxu0 0.0
    %256 = vmatprep.subr.mxu0 0.0
    %257 = vmatpush1.msra.mxu0 0.0
    %258 = vmatprep.subr.mxu0 0.0
    %259 = vmatpush1.msra.mxu0 0.0
    %260 = vmatprep.subr.mxu0 0.0
    %261 = vmatpush1.msra.mxu0 0.0
    %262 = vmatprep.subr.mxu0 0.0
    %263 = vmatpush1.msra.mxu0 0.0
    %264 = vmatprep.subr.mxu0 0.0
    %265 = vmatpush1.msra.mxu0 0.0
    %266 = vmatprep.subr.mxu0 0.0
    %267 = vmatpush1.msra.mxu0 0.0
    %268 = vmatprep.subr.mxu0 0.0
    %269 = vmatpush1.msra.mxu0 0.0
    %270 = vmatprep.subr.mxu0 0.0
    %271 = vmatpush1.msra.mxu0 0.0
    %272 = vmatprep.subr.mxu0 0.0
    %273 = vmatpush1.msra.mxu0 0.0
    %274 = vmatprep.subr.mxu0 0.0
    %275 = vmatpush1.msra.mxu0 0.0
    %276 = vmatprep.subr.mxu0 0.0
    %277 = vmatpush1.msra.mxu0 0.0
    %278 = vmatprep.subr.mxu0 0.0
    %279 = vmatpush1.msra.mxu0 0.0
    %280 = vmatprep.subr.mxu0 0.0
    %281 = vmatpush1.msra.mxu0 0.0
    %282 = vmatprep.subr.mxu0 0.0
    %283 = vmatpush1.msra.mxu0 0.0
    %284 = vmatprep.subr.mxu0 0.0
    %285 = vmatpush1.msra.mxu0 0.0
    %286 = vmatprep.subr.mxu0 0.0
    %287 = vmatpush1.msra.mxu0 0.0
    %288 = vmatprep.subr.mxu0 0.0
    %289 = vmatpush1.msra.mxu0 0.0
    %290 = vmatprep.subr.mxu0 0.0
    %291 = vmatpush1.msra.mxu0 0.0
    %292 = vmatprep.subr.mxu0 0.0
    %293 = vmatpush1.msra.mxu0 0.0
    %294 = vmatprep.subr.mxu0 0.0
    %295 = vmatpush1.msra.mxu0 0.0
    %296 = vmatprep.mubr.f32.mxu0 0.0
    %297 = vmatmul.mubr.f32.gmra.mrb[0].mxu0 %v223
    %v298 = vpop.f32.mrb[0].mxu0
    %v299 = vadd.f32 0.0, %v298
    %v300 = vpop.f32.mrb[0].mxu0
    %301 = vmatprep.mubr.f32.mxu0 0.0
    %302 = vmatmul.mubr.f32.gmra.mrb[0].mxu0 %v226
    %v303 = vpop.f32.mrb[0].mxu0
    %v304 = vadd.f32 0.0, %v303
    %v305 = vpop.f32.mrb[0].mxu0
    %306 = vdwg.mxu0
    %v307 = vadd.f32 %v208, %v299
    %v308 = vadd.f32 %v209, %v304
    %309 = vst.msk [vmem:[#allocation2] sm:$0xff] %vm31, %v307
    %310 = vst.msk [vmem:[#allocation2 + $0x8] sm:$0xff] %vm31, %v308
    // Predicated region
    $region22: #{activation_gating.1} parent=1 // pred_check
      %p311 = pneg %p18
    $region23: #{activation_gating.1} parent=1 // pred_check_branch
      %313 = sbr.rel (%p311) target = $region25
    $region24: #{activation_gating.1} parent=1 // pred_region
      %v314 = vld [vmem:[#allocation2] sm:$0xff]
      %v315 = vld [vmem:[#allocation2 + $0x8] sm:$0xff]
      %316 = vst.msk [vmem:[#allocation3] sm:$0xff] %vm31, %v314
      %317 = vst.msk [vmem:[#allocation3 + $0x8] sm:$0xff] %vm31, %v315
    $region25: #{activation_gating.1} parent=1 // pred_fallthru
      _
    // Predicated region
    $region26: #{activation_gating.1} parent=1 // pred_check
      _
    $region27: #{activation_gating.1} parent=1 // pred_check_branch
      %319 = sbr.rel (0) target = $region29
    $region28: #{activation_gating.1} parent=1 // pred_region
      %s321 = ssub.s32 256, 256
      %322 = vsyncadd [#allocation4], %s321
      %s323 = sshll.u32 [#allocation3], 4
      %s324 = int_to_ptr.vmem [resolvable:$true] %s323
      %329 = dma.vmem_to_hbm [thread:$0]  %s324, 256, %s4, [#allocation4], 128, 128, 8
    $region29: #{activation_gating.1} parent=1 // pred_fallthru
      _
    // Predicated region
    $region30: #{activation_gating.1} parent=1 // pred_check
      _
    $region31: #{activation_gating.1} parent=1 // pred_check_branch
      %331 = sbr.rel (0) target = $region33
    $region32: #{activation_gating.1} parent=1 // pred_region
      %332 = dma.done [#allocation4], 256
    $region33: #{activation_gating.1} parent=1 // pred_fallthru
      _
    %333 = vsyncpa [#allocation4], 1

</llo_original>
